<compile_context>
chip_gen: v6e
topology: v6e:2x2x1
jax: 0.10.0
libtpu: 0.0.40
codegen_flags: <defaults>
</compile_context>

<pallas_src>
import functools

import jax
import jax.numpy as jnp
from jax.experimental import pallas as pl
from jax.experimental.pallas import tpu as pltpu

EPS = 1e-6

# Per-buffer tile cap: streaming kernels hit the HBM-roofline plateau around
# 1-4 MiB tiles; bigger buys nothing and inflates VMEM pressure (v7x: 64 MiB).
_TILE_BYTES_CAP = 4 * 1024 * 1024
# Scoped-VMEM limit: above the 16/32 MiB defaults, well below v7x's 64 MiB.
_VMEM_LIMIT_BYTES = 40 * 1024 * 1024
# Aim for at least this many grid steps so DMA/compute overlap actually runs.
_MIN_GRID_STEPS = 4


def _row_dim_semantics():
    """CORE_PARALLEL only on v7x (2 TCs/chip); plain 'parallel' elsewhere."""
    try:
        kind = jax.devices()[0].device_kind.lower()
    except Exception:
        kind = ""
    if "v7" in kind and hasattr(pltpu, "CORE_PARALLEL"):
        return (pltpu.CORE_PARALLEL,)
    return ("parallel",)


def _pick_row_tile(rows: int, feat: int, itemsize: int) -> int:
    """Row tile: <= ~4 MiB per buffer (f32-accounted), multiple of 8, and small
    enough that the grid has several steps (never a single-block grid)."""
    if rows <= 8:
        return rows                               # full extent: always legal
    per_row_bytes = feat * max(itemsize, 4)       # kernel widens bf16 -> f32
    cap = max(8, (_TILE_BYTES_CAP // per_row_bytes) // 8 * 8)
    target = -(-rows // _MIN_GRID_STEPS)          # cdiv(rows, MIN_GRID_STEPS)
    target = max(8, ((target + 7) // 8) * 8)      # 8-row aligned
    return min(cap, target)


def _norm_kernel(x_ref, scale_ref, o_ref, *, feat, add_residual):
    # x_ref: (row_tile, feat).  scale_ref: (1, feat) f32 = alpha / bias.
    x = x_ref[...]
    xf = x.astype(jnp.float32)

    # Reductions in f32.  diff is computed once and reused for var and output.
    mean = jnp.mean(xf, axis=-1, keepdims=True)
    diff = xf - mean
    # torch.std default = unbiased (divide by feat - 1); feat == 1 -> NaN,
    # matching PyTorch.
    inv_nm1 = (1.0 / (feat - 1)) if feat > 1 else float("nan")
    var = jnp.sum(diff * diff, axis=-1, keepdims=True) * inv_nm1
    std = jnp.sqrt(var)

    scale = scale_ref[...]                         # f32, full parameter precision

    if x.dtype == jnp.bfloat16:
        # bf16 elementwise path (v6e/v7x bf16 VALU; halves vreg pressure).  On
        # v5e the compiler widens bf16 arithmetic automatically — still correct.
        out = (scale.astype(jnp.bfloat16) * diff.astype(jnp.bfloat16)
               + (std + EPS).astype(jnp.bfloat16))
        if add_residual:                           # fused x + norm(x)
            out = x + out
    else:
        out = scale * diff + std + EPS
        if add_residual:
            out = xf + out
    o_ref[...] = out.astype(o_ref.dtype)


def _norm_call(x, alpha, bias, *, add_residual):
    orig_shape = x.shape
    f = orig_shape[-1]
    rows = x.size // f
    x2 = x.reshape(rows, f)

    # Fold parameters once, in f32 (literal formula divides by bias; with the
    # module's zero-initialized bias this yields inf/NaN exactly as PyTorch).
    scale = (alpha.astype(jnp.float32) / bias.astype(jnp.float32)).reshape(1, f)

    rt = _pick_row_tile(rows, f, jnp.dtype(x.dtype).itemsize)
    grid = (pl.cdiv(rows, rt),)

    out = pl.pallas_call(
        functools.partial(_norm_kernel, feat=f, add_residual=add_residual),
        out_shape=jax.ShapeDtypeStruct((rows, f), x.dtype),
        grid_spec=pltpu.PrefetchScalarGridSpec(
            num_scalar_prefetch=0,
            grid=grid,
            in_specs=[
                # If xprof ever shows exposed DMA on v5e/v6e, this spec can take
                # pipeline_mode=pl.Buffered(3); do NOT copy that to v7x (64 MiB).
                pl.BlockSpec((rt, f), lambda i: (i, 0)),
                pl.BlockSpec((1, f), lambda i: (0, 0)),   # scale: replicated VMEM
            ],
            out_specs=pl.BlockSpec((rt, f), lambda i: (i, 0)),
        ),
        compiler_params=pltpu.CompilerParams(
            dimension_semantics=_row_dim_semantics(),
            vmem_limit_bytes=_VMEM_LIMIT_BYTES,
        ),
    )(x2, scale)
    return out.reshape(orig_shape)


def layer_normalization(x, alpha, bias):
    """The module's LayerNormalization.forward (literal formula)."""
    return _norm_call(x, alpha, bias, add_residual=False)


def residual_connection(x, alpha, bias, sublayer):
    """ResidualConnection.forward: x + dropout(sublayer(norm(x))).

    `sublayer` is an arbitrary JAX callable, so only the norm is a Pallas
    kernel; the residual add is a plain jnp add so XLA fuses it into the
    sublayer's epilogue (no extra HBM round-trip from a standalone kernel).
    """
    normed = layer_normalization(x, alpha, bias)
    sub_out = sublayer(normed)
    # TODO(synk): the module stores `self.dropout = dropout` (a float) and then
    # calls it, which would raise in PyTorch; dropout is treated here as the
    # inference-mode identity (no mask, no scaling).
    return x + sub_out.astype(x.dtype)


def residual_connection_fused(x, alpha, bias):
    """Single-pass x + norm(x) for the identity-sublayer / identity-dropout
    case: one HBM read and one write (halves traffic vs norm-then-add)."""
    return _norm_call(x, alpha, bias, add_residual=True)


if __name__ == "__main__":
    # Small demo shapes; feat is a multiple of 128 so stores are lane-dense.
    batch, seq, feat = 2, 8, 128
    key = jax.random.PRNGKey(0)
    kx, ka = jax.random.split(key)
    x = jax.random.normal(kx, (batch, seq, feat), dtype=jnp.float32)
    sublayer = lambda t: 0.5 * t

    # 1) Literal module init (alpha=ones, bias=zeros): the division by bias
    #    yields inf/NaN exactly as the PyTorch forward would — must still run.
    alpha0 = jnp.ones((feat,), dtype=jnp.float32)
    bias0 = jnp.zeros((feat,), dtype=jnp.float32)
    y0 = residual_connection(x, alpha0, bias0, sublayer)
    jax.block_until_ready(y0)

    # 2) Non-degenerate parameters: numerical self-check vs a pure-JAX
    #    reference of the literal formula.
    alpha = 1.0 + 0.1 * jax.random.normal(ka, (feat,), dtype=jnp.float32)
    bias = 0.5 + 0.05 * jnp.arange(feat, dtype=jnp.float32) / feat

    def norm_ref(t):
        m = jnp.mean(t, axis=-1, keepdims=True)
        s = jnp.std(t, axis=-1, keepdims=True, ddof=1)   # unbiased, like torch.std
        return alpha * (t - m) / bias + s + EPS

    y = residual_connection(x, alpha, bias, sublayer)
    y_ref = x + sublayer(norm_ref(x))
    assert jnp.allclose(y, y_ref, rtol=1e-4, atol=1e-4), "residual_connection mismatch"

    y_fused = residual_connection_fused(x, alpha, bias)
    y_fused_ref = x + norm_ref(x)
    assert jnp.allclose(y_fused, y_fused_ref, rtol=1e-4, atol=1e-4), "fused mismatch"

    jax.block_until_ready((y, y_fused))
    print("KERNEL_OK")
</pallas_src>

<mosaic_0001>
module attributes {stable_mosaic.version = 11 : i64} {
  func.func @_norm_kernel(%arg0: i32, %arg1: memref<8x128xf32, #tpu.memory_space<vmem>>, %arg2: memref<1x128xf32, #tpu.memory_space<vmem>>, %arg3: memref<8x128xf32, #tpu.memory_space<vmem>>) attributes {dimension_semantics = [#tpu.dimension_semantics<parallel>], iteration_bounds = array<i64: 2>, scalar_prefetch = 0 : i64, scratch_operands = 0 : i64, tpu.core_type = #tpu.core_type<tc>, window_params = [{transform_indices = @transform_0, window_bounds = array<i64: 8, 128>}, {pipeline_mode = #tpu.pipeline_mode<synchronous>, transform_indices = @transform_1, window_bounds = array<i64: 1, 128>}, {transform_indices = @transform_2, window_bounds = array<i64: 8, 128>}]} {
    %c0 = arith.constant 0 : index
    %c0_0 = arith.constant 0 : index
    %0 = vector.load %arg1[%c0, %c0_0] : memref<8x128xf32, #tpu.memory_space<vmem>>, vector<8x128xf32>
    %cst = arith.constant dense<0.000000e+00> : vector<8xf32>
    %1 = vector.multi_reduction <add>, %0, %cst [1] : vector<8x128xf32> to vector<8xf32>
    %2 = vector.shape_cast %1 : vector<8xf32> to vector<8x1xf32>
    %cst_1 = arith.constant 1.280000e+02 : f32
    %3 = vector.broadcast %cst_1 : f32 to vector<8x1xf32>
    %4 = arith.divf %2, %3 : vector<8x1xf32>
    %5 = vector.broadcast %4 : vector<8x1xf32> to vector<8x128xf32>
    %6 = arith.subf %0, %5 : vector<8x128xf32>
    %7 = arith.mulf %6, %6 : vector<8x128xf32>
    %cst_2 = arith.constant dense<0.000000e+00> : vector<8xf32>
    %8 = vector.multi_reduction <add>, %7, %cst_2 [1] : vector<8x128xf32> to vector<8xf32>
    %9 = vector.shape_cast %8 : vector<8xf32> to vector<8x1xf32>
    %cst_3 = arith.constant 0.00787401571 : f32
    %10 = vector.broadcast %cst_3 : f32 to vector<8x1xf32>
    %11 = arith.mulf %9, %10 : vector<8x1xf32>
    %12 = math.sqrt %11 : vector<8x1xf32>
    %c0_4 = arith.constant 0 : index
    %c0_5 = arith.constant 0 : index
    %13 = vector.load %arg2[%c0_4, %c0_5] : memref<1x128xf32, #tpu.memory_space<vmem>>, vector<1x128xf32>
    %14 = vector.broadcast %13 : vector<1x128xf32> to vector<8x128xf32>
    %15 = arith.mulf %14, %6 : vector<8x128xf32>
    %16 = vector.broadcast %12 : vector<8x1xf32> to vector<8x128xf32>
    %17 = arith.addf %15, %16 : vector<8x128xf32>
    %cst_6 = arith.constant 9.99999997E-7 : f32
    %18 = vector.broadcast %cst_6 : f32 to vector<8x128xf32>
    %19 = arith.addf %17, %18 : vector<8x128xf32>
    %c0_7 = arith.constant 0 : index
    %c0_8 = arith.constant 0 : index
    %20 = vector.load %arg3[%c0_7, %c0_8] : memref<8x128xf32, #tpu.memory_space<vmem>>, vector<8x128xf32>
    tpu.vector_store %arg3[%c0_7, %c0_8], %19 {strides = array<i32>} : memref<8x128xf32, #tpu.memory_space<vmem>>, vector<8x128xf32>,
    return
  }
  func.func @transform_0(%arg0: i32) -> (i32, i32) {
    %c0_i32 = arith.constant 0 : i32
    %c0_i32_0 = arith.constant 0 : i32
    return %arg0, %c0_i32 : i32, i32
  }
  func.func @transform_1(%arg0: i32) -> (i32, i32) {
    %c0_i32 = arith.constant 0 : i32
    %c0_i32_0 = arith.constant 0 : i32
    %c0_i32_1 = arith.constant 0 : i32
    return %c0_i32, %c0_i32_0 : i32, i32
  }
  func.func @transform_2(%arg0: i32) -> (i32, i32) {
    %c0_i32 = arith.constant 0 : i32
    %c0_i32_0 = arith.constant 0 : i32
    return %arg0, %c0_i32 : i32, i32
  }
}

</mosaic_0001>

<llo_original>
// kernel: tpu_custom_call.1
$region0: #{tpu_custom_call.1}
  #allocation0 [shape = 'u32[]', space=smem, size = 0x4, offset = 0x4, fixed_abs, tag = 'smem constant byte address 0x4 - core index']
  #allocation1 [shape = 'u32[144,128]{1,0:T(1,128)}', space=vmem, size = 0x12000, scoped, tag = 'internal scratch']
  %s0 = inlined_call_operand.hbm [shape: f32[16,128], index: 0, kind: input, shape index: {}]
  %s1 = inlined_call_operand.vmem [shape: f32[1,128], index: 1, kind: input, shape index: {}]
  %s2 = inlined_call_operand.hbm [shape: f32[16,128], index: 2, kind: output, shape index: {}]
  %s3 = sld [smem:[#allocation0]]
  $region45: #{tpu_custom_call.1} parent=0
    _
  %s5 = ssub.s32 1, %s3
  %s6 = scalar_select 0, %s5, %s3
  $region1: #{tpu_custom_call.1} parent=0
    #allocation2 [shape = 'u8[8192]{0}', space=vmem, size = 0x2000, scoped, tag = 'input window, operand 0']
    #allocation3 [shape = 's32[2]{0}', space=sflag, size = 0x8, scoped, tag = 'scoped memory for tpu_custom_call.1']
    #allocation4 [shape = 's32[2]{0}', space=sflag, size = 0x8, scoped, tag = 'scoped memory for tpu_custom_call.1']
    #allocation5 [shape = 'u8[8192]{0}', space=vmem, size = 0x2000, scoped, tag = 'output window, operand 0']
    %7 = vsyncpa [#allocation3], 0
    %s8 = scalar_lea.sflag [#allocation3], 1
    %9 = vsyncpa %s8, 0
    %10 = vsyncpa [#allocation4], 0
    %s11 = scalar_lea.sflag [#allocation4], 1
    %12 = vsyncpa %s11, 0
    loop: start=0, step=1, limit=4
    $region2: #{tpu_custom_call.1} parent=1 // loop_pre_header
      _
    $region3: #{tpu_custom_call.1} parent=1 // loop_header
      %s14 = sphi 0, %s18
      %p15 = scmp.ge.s32.totalorder %s14, 4
      %s24 = sphi 0, %s26
      %s27 = sphi 0, %s24
      %s28 = sphi 0, %s27
      %s44 = sphi 0, %s28
      %s48 = sphi 0, %s48
      %s50 = sphi 0, %s48
      %s51 = sphi 0, %s50
      %s65 = sphi 0, %s51
      %s71 = sphi 0, %s73
      %s74 = sphi 0, %s71
      %s75 = sphi 0, %s74
      %s91 = sphi 0, %s75
    $region4: #{tpu_custom_call.1} parent=1 // loop_header_branch
      %17 = sbr.rel (%p15) target = $region8
    $region5: #{tpu_custom_call.1} parent=1 // loop_body
      %s19 = ssub.s32 %s14, 1
      %s20 = ssub.s32 %s14, 2
      %s21 = sadd.s32 %s14, 1
      %s22 = ssub.s32 %s14, %s21
      %p23 = scmp.eq.s32.totalorder %s22, 0
      %s25 = sadd.s32 %s24, 1
      %s26 = scalar_select %p23, %s24, %s25
      %p29 = pneg %p23
      %p30 = scmp.eq.s32.totalorder %s14, 1
      %p31 = por %p29, %p30
      %p32 = scmp.ne.s32.totalorder %s24, %s27
      %p33 = scmp.eq.s32.totalorder %s14, 0
      %p34 = por %p32, %p33
      %p35 = scmp.ne.s32.totalorder %s24, %s27
      %p36 = scmp.eq.s32.totalorder %s19, 1
      %p37 = por %p35, %p36
      %p38 = scmp.ne.s32.totalorder %s27, %s28
      %p39 = scmp.eq.s32.totalorder %s19, 0
      %p40 = por %p38, %p39
      %p41 = scmp.ne.s32.totalorder %s27, %s28
      %p42 = scmp.eq.s32.totalorder %s20, 1
      %p43 = por %p41, %p42
      %p45 = scmp.ne.s32.totalorder %s28, %s44
      %p46 = scmp.eq.s32.totalorder %s20, 0
      %p47 = por %p45, %p46
      %s49 = sadd.s32 %s48, 1
      %p52 = scmp.eq.s32.totalorder %s14, 1
      %p53 = scmp.ne.s32.totalorder %s48, %s50
      %p54 = scmp.eq.s32.totalorder %s14, 0
      %p55 = por %p53, %p54
      %p56 = scmp.ne.s32.totalorder %s48, %s50
      %p57 = scmp.eq.s32.totalorder %s19, 1
      %p58 = por %p56, %p57
      %p59 = scmp.ne.s32.totalorder %s50, %s51
      %p60 = scmp.eq.s32.totalorder %s19, 0
      %p61 = por %p59, %p60
      %p62 = scmp.ne.s32.totalorder %s50, %s51
      %p63 = scmp.eq.s32.totalorder %s20, 1
      %p64 = por %p62, %p63
      %p66 = scmp.ne.s32.totalorder %s51, %s65
      %p67 = scmp.eq.s32.totalorder %s20, 0
      %p68 = por %p66, %p67
      %s69 = ssub.s32 %s14, %s21
      %p70 = scmp.eq.s32.totalorder %s69, 0
      %s72 = sadd.s32 %s71, 1
      %s73 = scalar_select %p70, %s71, %s72
      %p76 = pneg %p70
      %p77 = scmp.eq.s32.totalorder %s14, 1
      %p78 = por %p76, %p77
      %p79 = scmp.ne.s32.totalorder %s71, %s74
      %p80 = scmp.eq.s32.totalorder %s14, 0
      %p81 = por %p79, %p80
      %p82 = scmp.ne.s32.totalorder %s71, %s74
      %p83 = scmp.eq.s32.totalorder %s19, 1
      %p84 = por %p82, %p83
      %p85 = scmp.ne.s32.totalorder %s74, %s75
      %p86 = scmp.eq.s32.totalorder %s19, 0
      %p87 = por %p85, %p86
      %p88 = scmp.ne.s32.totalorder %s74, %s75
      %p89 = scmp.eq.s32.totalorder %s20, 1
      %p90 = por %p88, %p89
      %p92 = scmp.ne.s32.totalorder %s75, %s91
      %p93 = scmp.eq.s32.totalorder %s20, 0
      %p94 = por %p92, %p93
      %p95 = scmp.le.s32.totalorder 1, %s14
      %p96 = scmp.lt.s32.totalorder %s14, 3
      %p97 = pnand %p95, %p96
      %p98 = pneg %p97
      // Predicated region
      $region9: #{tpu_custom_call.1} parent=5 // pred_check
        _
      $region10: #{tpu_custom_call.1} parent=5 // pred_check_branch
        %100 = sbr.rel (%p97) target = $region12
      $region11: #{tpu_custom_call.1} parent=5 // pred_region
        %s101 = ssub.s32 %s14, 1
        // Predicated region
        $region13: #{tpu_custom_call.1} parent=11 // pred_check
          %p102 = pneg %p61
        $region14: #{tpu_custom_call.1} parent=11 // pred_check_branch
          %104 = sbr.rel (%p102) target = $region16
        $region15: #{tpu_custom_call.1} parent=11 // pred_region
          _
        $region16: #{tpu_custom_call.1} parent=11 // pred_fallthru
          _
      $region12: #{tpu_custom_call.1} parent=5 // pred_fallthru
        _
      %p105 = scmp.lt.s32.totalorder %s14, 2
      // Predicated region
      $region17: #{tpu_custom_call.1} parent=5 // pred_check
        %p106 = pneg %p105
      $region18: #{tpu_custom_call.1} parent=5 // pred_check_branch
        %108 = sbr.rel (%p106) target = $region20
      $region19: #{tpu_custom_call.1} parent=5 // pred_region
        // Predicated region
        $region21: #{tpu_custom_call.1} parent=19 // pred_check
          %p109 = pneg %p34
        $region22: #{tpu_custom_call.1} parent=19 // pred_check_branch
          %111 = sbr.rel (%p109) target = $region24
        $region23: #{tpu_custom_call.1} parent=19 // pred_region
          %s112 = sand.u32 %s24, 1
          %s113 = scalar_lea.sflag [#allocation3], %s112
          %s114 = sand.u32 %s24, 1
          %s115 = smul.addr %s114, 8
          %s116 = scalar_lea.vmem [#allocation2], %s115
          %s118 = ssub.s32 128, 128
          %119 = vsyncadd %s113, %s118
          %s120 = smul.addr %s14, 128
          %s121 = scalar_lea.hbm %s0, %s120
          %s123 = sshll.u32 %s116, 4
          %s124 = int_to_ptr.vmem [resolvable:$true] %s123
          %126 = dma.hbm_to_vmem [thread:$0]  %s121, 128, %s124, %s113
        $region24: #{tpu_custom_call.1} parent=19 // pred_fallthru
          _
      $region20: #{tpu_custom_call.1} parent=5 // pred_fallthru
        _
      %p127 = scmp.le.s32.totalorder 1, %s14
      %p128 = scmp.lt.s32.totalorder %s14, 3
      %p129 = pnand %p127, %p128
      %p130 = pneg %p129
      // Predicated region
      $region25: #{tpu_custom_call.1} parent=5 // pred_check
        _
      $region26: #{tpu_custom_call.1} parent=5 // pred_check_branch
        %132 = sbr.rel (%p129) target = $region28
      $region27: #{tpu_custom_call.1} parent=5 // pred_region
        %s133 = ssub.s32 %s14, 1
        %s134 = sand.u32 %s27, 1
        %s135 = scalar_lea.sflag [#allocation3], %s134
        %s136 = sand.u32 %s27, 1
        %s137 = smul.addr %s136, 8
        %s138 = scalar_lea.vmem [#allocation2], %s137
        // Predicated region
        $region29: #{tpu_custom_call.1} parent=27 // pred_check
          %p139 = pneg %p40
        $region30: #{tpu_custom_call.1} parent=27 // pred_check_branch
          %141 = sbr.rel (%p139) target = $region32
        $region31: #{tpu_custom_call.1} parent=27 // pred_region
          %142 = dma.done %s135, 128
        $region32: #{tpu_custom_call.1} parent=27 // pred_fallthru
          _
        %s143 = sand.u32 %s27, 1
        %s144 = scalar_lea.sflag [#allocation3], %s143
        %s145 = sand.u32 %s27, 1
        %s146 = smul.addr %s145, 8
        %s147 = scalar_lea.vmem [#allocation2], %s146
        %p148 = pneg %p40
        %p149 = pneg %p37
        %p150 = pneg %p61
        %p151 = pneg %p58
        %p152 = pneg %p87
        %p153 = pneg %p84
        %s154 = sand.u32 %s74, 1
        %s155 = scalar_lea.sflag [#allocation4], %s154
        %s156 = sand.u32 %s74, 1
        %s157 = smul.addr %s156, 8
        %s158 = scalar_lea.vmem [#allocation5], %s157
        %v159 = vld [vmem:[%s138] sm:$0xff]
        %160 = vadd.xlane.f32.xlu0 %v159
        %v161 = vpop.xlane.xlu0 %160
        %v162 = vrcp.pop 128.0
        %v163 = vmul.f32 %v161, %v162
        %v164 = vsub.f32 %v159, %v163
        %v165 = vmul.f32 %v164, %v164
        %166 = vadd.xlane.f32.xlu0 %v165
        %v167 = vpop.xlane.xlu0 %166
        %v168 = vmul.f32 %v167, 0.007874016
        %v169 = vrsqrt.pop %v168
        %v170 = vmul.f32 %v168, %v169
        %vm171 = vcmp.eq.f32.partialorder %v168, inf
        %v172 = vsel %vm171, %v168, %v170
        %vm173 = vcmp.eq.f32.partialorder %v168, 0.0
        %v174 = vand.u32 %v168, 2147483648
        %v175 = vsel %vm173, %v174, %v172
        %v176 = vld [vmem:[%s1] sm:$0x1]
        %v178 = vlaneseq
        %v179 = vshrl.u32 %v178, 7
        %v180 = vsub.s32 0, %v179
        %v181 = vrot.slane %v176, %v180
        %v183 = vmul.f32 %v181, %v164
        %v184 = vadd.f32 %v183, %v175
        %v185 = vadd.f32 %v184, 1e-06
        %186 = vst [vmem:[%s158] sm:$0xff] %v185
        %s187 = sand.u32 %s74, 1
        %s188 = scalar_lea.sflag [#allocation4], %s187
        %s189 = sand.u32 %s74, 1
        %s190 = smul.addr %s189, 8
        %s191 = scalar_lea.vmem [#allocation5], %s190
        // Predicated region
        $region33: #{tpu_custom_call.1} parent=27 // pred_check
          %p192 = pneg %p84
        $region34: #{tpu_custom_call.1} parent=27 // pred_check_branch
          %194 = sbr.rel (%p192) target = $region36
        $region35: #{tpu_custom_call.1} parent=27 // pred_region
          %s196 = ssub.s32 128, 128
          %197 = vsyncadd %s188, %s196
          %s198 = smul.addr %s19, 128
          %s199 = scalar_lea.hbm %s2, %s198
          %s201 = sshll.u32 %s191, 4
          %s202 = int_to_ptr.vmem [resolvable:$true] %s201
          %204 = dma.vmem_to_hbm [thread:$0]  %s202, 128, %s199, %s188
        $region36: #{tpu_custom_call.1} parent=27 // pred_fallthru
          _
      $region28: #{tpu_custom_call.1} parent=5 // pred_fallthru
        _
      %p205 = scmp.le.s32.totalorder 2, %s14
      // Predicated region
      $region37: #{tpu_custom_call.1} parent=5 // pred_check
        %p206 = pneg %p205
      $region38: #{tpu_custom_call.1} parent=5 // pred_check_branch
        %208 = sbr.rel (%p206) target = $region40
      $region39: #{tpu_custom_call.1} parent=5 // pred_region
        %s209 = ssub.s32 %s14, 2
        // Predicated region
        $region41: #{tpu_custom_call.1} parent=39 // pred_check
          %p210 = pneg %p90
        $region42: #{tpu_custom_call.1} parent=39 // pred_check_branch
          %212 = sbr.rel (%p210) target = $region44
        $region43: #{tpu_custom_call.1} parent=39 // pred_region
          %s213 = sand.u32 %s75, 1
          %s214 = scalar_lea.sflag [#allocation4], %s213
          %s215 = sand.u32 %s75, 1
          %s216 = smul.addr %s215, 8
          %s217 = scalar_lea.vmem [#allocation5], %s216
          %218 = dma.done %s214, 128
        $region44: #{tpu_custom_call.1} parent=39 // pred_fallthru
          _
      $region40: #{tpu_custom_call.1} parent=5 // pred_fallthru
        _
    $region6: #{tpu_custom_call.1} parent=1 // loop_footer
      %s18 = sadd.s32 1, %s14
    $region7: #{tpu_custom_call.1} parent=1 // loop_footer_branch
      %13 = sbr.rel target = $region3
    $region8: #{tpu_custom_call.1} parent=1 // loop_exit
      _
    %219 = vsyncpa [#allocation3], 1
    %s220 = scalar_lea.sflag [#allocation3], 1
    %221 = vsyncpa %s220, 1
    %222 = vsyncpa [#allocation4], 1
    %s223 = scalar_lea.sflag [#allocation4], 1
    %224 = vsyncpa %s223, 1

</llo_original>
